<compile_context>
chip_gen: v7x
topology: tpu7x:2x2x1
jax: 0.10.0
libtpu: 0.0.40
codegen_flags: <defaults>
</compile_context>

<pallas_src>
import jax
import jax.numpy as jnp
from jax.experimental import pallas as pl
from jax.experimental.pallas import tpu as pltpu

NEG_SLOPE = 0.2  # RAVE uses LeakyReLU(.2) in its residual blocks


def _leaky(x):
    return jnp.where(x > 0, x, NEG_SLOPE * x)


def residual_kernel(x_ref, halo_ref, w1_ref, b1_ref, w2_ref, b2_ref, o_ref, hs_ref):
    # x_ref   : (C, Lt)      un-padded, lane-aligned input tile (f32)
    # halo_ref: (C, 2)       [:,0] = column just left of the tile, [:,1] = just right
    #                        (zeros at the global sequence boundaries)
    # w1_ref  : (C, 3C)      k=3 conv weights, taps fused into the contraction (bf16)
    # b1_ref  : (C, 1)       f32
    # w2_ref  : (C, C)       k=1 conv weights (bf16)
    # b2_ref  : (C, 1)       f32
    # o_ref   : (C, Lt)
    # hs_ref  : (3C, Lt)     bf16 scratch holding the fused 3-tap MXU operand
    C, Lt = x_ref.shape

    x = x_ref[...]
    h = _leaky(x)                      # leaky(0)==0, so it commutes with zero padding

    hl = _leaky(halo_ref[:, 0:1])      # (C, 1) neighbour column on the left  (t = -1)
    hr = _leaky(halo_ref[:, 1:2])      # (C, 1) neighbour column on the right (t = Lt)

    # Build the fused 3-tap operand directly in the bf16 scratch slab:
    # rows [k*C, (k+1)*C) hold tap k, i.e. hs[k*C + i, t] = leaky(x)[i, t-1+k].
    # Shifted taps via XLU roll; only the wrapped-around column is patched.
    hs_ref[0:C, :] = pltpu.roll(h, shift=1, axis=1).astype(jnp.bfloat16)        # h[:, t-1]
    hs_ref[C:2 * C, :] = h.astype(jnp.bfloat16)                                 # h[:, t]
    hs_ref[2 * C:3 * C, :] = pltpu.roll(h, shift=Lt - 1, axis=1).astype(jnp.bfloat16)  # h[:, t+1]
    # Single-column edge fixes (no iota / full-tile where).
    hs_ref[0:C, 0:1] = hl.astype(jnp.bfloat16)
    hs_ref[2 * C:3 * C, Lt - 1:Lt] = hr.astype(jnp.bfloat16)

    # Conv k=3 as ONE MXU matmul over the fused 3C-deep contraction:
    # (C, 3C) @ (3C, Lt), bf16 operands, f32 accumulation.
    y1 = jnp.dot(w1_ref[...], hs_ref[...], preferred_element_type=jnp.float32) + b1_ref[...]

    h2 = _leaky(y1)
    y2 = jnp.dot(w2_ref[...], h2.astype(jnp.bfloat16),
                 preferred_element_type=jnp.float32) + b2_ref[...]

    # Residual add: the x tile is already the exact (f32) residual, fully aligned.
    o_ref[...] = (y2 + x).astype(o_ref.dtype)


def _pick_l_tile(lpad, c):
    """Largest multiple-of-128 divisor of lpad within the per-C VMEM budget.

    Per-column working set ~= 40*C bytes (double-buffered f32 x/out tiles, bf16
    tap scratch, f32 intermediates); the cap keeps the per-step working set well
    under v7x's 64 MiB physical VMEM even at C=512 while preferring big tiles
    (tile-size curve: 128 -> ~29% of HBM roofline, 512 -> ~85%, 1024 -> ~86%).
    """
    cap = ((36 << 20) // (40 * c)) // 128 * 128
    cap = max(128, min(1024, cap))
    best = 128
    for lt in range(128, min(lpad, cap) + 1, 128):
        if lpad % lt == 0:
            best = lt
    return best


def _vmem_limit_bytes(c, lt, k=3):
    """Explicit scoped-VMEM budget (defaults are 16 MiB v5e / 32 MiB v6e-v7x)."""
    c8 = ((c + 7) // 8) * 8
    est = (
        2 * c * lt * 4                    # x tiles, double-buffered
        + 2 * c * lt * 4                  # out tiles, double-buffered
        + 3 * c * lt * 2                  # bf16 fused-tap scratch
        + 6 * c * lt * 4                  # live f32 intermediates (h, rolls, y1, y2)
        + 2 * (c * k * c + c * c) * 2     # resident bf16 weights (double-buffered)
        + 4 * c8 * 128 * 4                # halo / bias blocks (lane-padded)
    )
    # 1.5x headroom, clamped to [8 MiB, 48 MiB] so it also fits v7x's 64 MiB part.
    return int(min(max(int(est * 1.5), 8 << 20), 48 << 20))


def residual_forward(x, w1, b1, w2, b2, l_tile=None):
    """x: (B, C, L) f32, w1: (C, C, 3), b1: (C,), w2: (C, C), b2: (C,) -> (B, C, L)."""
    B, C, L = x.shape
    K = w1.shape[2]
    assert K == 3, "RAVE residual branch uses a k=3 conv"

    # Lane-dense output: pad L up to a multiple of 128 (padded tail is zeros;
    # leaky(0)==0 so the real tail sees exactly the 'same'-padding semantics;
    # the tail is sliced off below).  For a full RAVE stack, keep the
    # 128-padded length as the working shape across all blocks so this pad /
    # slice HBM round-trip happens once per network, not once per block.
    lpad = ((L + 127) // 128) * 128
    if lpad != L:
        x = jnp.pad(x, ((0, 0), (0, 0), (0, lpad - L)))
    lt = l_tile if l_tile is not None else _pick_l_tile(lpad, C)
    assert lpad % lt == 0
    nt = lpad // lt

    # One-column halos for each L tile (left/right neighbours; zero at the
    # global boundaries).  Tiny tensor: (B, nt, C, 2), ~4*C bytes of HBM per step.
    xt = x.reshape(B, C, nt, lt)
    left = jnp.roll(xt[:, :, :, -1], 1, axis=2).at[:, :, 0].set(0.0)    # prev tile's last col
    right = jnp.roll(xt[:, :, :, 0], -1, axis=2).at[:, :, -1].set(0.0)  # next tile's first col
    halo = jnp.transpose(jnp.stack([left, right], axis=-1), (0, 2, 1, 3))  # (B, nt, C, 2)

    # Fold the K taps into the contraction dim: w1r[o, k*C + i] = w1[o, i, k].
    w1r = jnp.transpose(w1, (0, 2, 1)).reshape(C, K * C).astype(jnp.bfloat16)
    w2b = w2.astype(jnp.bfloat16)
    b1c = b1.reshape(C, 1).astype(jnp.float32)
    b2c = b2.reshape(C, 1).astype(jnp.float32)

    out = pl.pallas_call(
        residual_kernel,
        out_shape=jax.ShapeDtypeStruct((B, C, lpad), x.dtype),
        grid_spec=pltpu.PrefetchScalarGridSpec(
            num_scalar_prefetch=0,
            grid=(B, nt),
            in_specs=[
                pl.BlockSpec((None, C, lt), lambda b, l: (b, 0, l)),          # x tile
                pl.BlockSpec((None, None, C, 2), lambda b, l: (b, l, 0, 0)),  # halo (tiny DMA)
                pl.BlockSpec((C, K * C), lambda b, l: (0, 0)),                # w1 (resident)
                pl.BlockSpec((C, 1), lambda b, l: (0, 0)),                    # b1 (resident)
                pl.BlockSpec((C, C), lambda b, l: (0, 0)),                    # w2 (resident)
                pl.BlockSpec((C, 1), lambda b, l: (0, 0)),                    # b2 (resident)
            ],
            out_specs=pl.BlockSpec((None, C, lt), lambda b, l: (b, 0, l)),
            scratch_shapes=[pltpu.VMEM((3 * C, lt), jnp.bfloat16)],           # fused-tap slab
        ),
        compiler_params=pltpu.CompilerParams(
            dimension_semantics=("parallel", "parallel"),
            vmem_limit_bytes=_vmem_limit_bytes(C, lt, K),
        ),
    )(x, halo, w1r, b1c, w2b, b2c)

    return out[:, :, :L] if lpad != L else out


def reference(x, w1, b1, w2, b2):
    """Pure-JAX f32 reference (cross-correlation, same as torch Conv1d)."""
    h = jnp.where(x > 0, x, NEG_SLOPE * x)
    y1 = jax.lax.conv_general_dilated(
        h, w1, window_strides=(1,), padding=((1, 1),),
        dimension_numbers=("NCH", "OIH", "NCH"),
    ) + b1[None, :, None]
    h2 = jnp.where(y1 > 0, y1, NEG_SLOPE * y1)
    y2 = jax.lax.conv_general_dilated(
        h2, w2[:, :, None], window_strides=(1,), padding=((0, 0),),
        dimension_numbers=("NCH", "OIH", "NCH"),
    ) + b2[None, :, None]
    return y2 + x


if __name__ == "__main__":
    B, C, K = 2, 16, 3

    key = jax.random.PRNGKey(0)
    kx, kw1, kb1, kw2, kb2 = jax.random.split(key, 5)

    w1 = jax.random.normal(kw1, (C, C, K), dtype=jnp.float32) * 0.1
    b1 = jax.random.normal(kb1, (C,), dtype=jnp.float32) * 0.1
    w2 = jax.random.normal(kw2, (C, C), dtype=jnp.float32) * 0.1
    b2 = jax.random.normal(kb2, (C,), dtype=jnp.float32) * 0.1

    # (L, l_tile) cases:
    #  (384, None): multiple-of-128 path; new tile picker runs it as ONE 384-wide tile.
    #  (384, 128) : forced multi-tile path, exercises interior halo columns.
    #  (300, None): ragged path (padded to 384 in the wrapper, sliced back).
    for L, lt in ((384, None), (384, 128), (300, None)):
        x = jax.random.normal(jax.random.fold_in(kx, L), (B, C, L), dtype=jnp.float32)
        out = jax.block_until_ready(residual_forward(x, w1, b1, w2, b2, l_tile=lt))
        ref = reference(x, w1, b1, w2, b2)
        assert out.shape == (B, C, L)
        # bf16 MXU operands -> loosened tolerance vs f32 reference.
        assert jnp.allclose(out, ref, atol=5e-2, rtol=5e-2), \
            f"mismatch vs reference at L={L}, l_tile={lt}"

    print("KERNEL_OK")
</pallas_src>

<mosaic_0001>
module attributes {stable_mosaic.version = 11 : i64} {
  func.func @residual_kernel(%arg0: i32, %arg1: i32, %arg2: memref<1x16x384xf32, #tpu.memory_space<vmem>>, %arg3: memref<1x1x16x2xf32, #tpu.memory_space<vmem>>, %arg4: memref<16x48xbf16, #tpu.memory_space<vmem>>, %arg5: memref<16x1xf32, #tpu.memory_space<vmem>>, %arg6: memref<16x16xbf16, #tpu.memory_space<vmem>>, %arg7: memref<16x1xf32, #tpu.memory_space<vmem>>, %arg8: memref<1x16x384xf32, #tpu.memory_space<vmem>>, %arg9: memref<48x384xbf16, #tpu.memory_space<vmem>>) attributes {dimension_semantics = [#tpu.dimension_semantics<parallel>, #tpu.dimension_semantics<parallel>], iteration_bounds = array<i64: 2, 1>, scalar_prefetch = 0 : i64, scratch_operands = 1 : i64, tpu.core_type = #tpu.core_type<tc>, window_params = [{transform_indices = @transform_0, window_bounds = array<i64: 1, 16, 384>}, {transform_indices = @transform_1, window_bounds = array<i64: 1, 1, 16, 2>}, {pipeline_mode = #tpu.pipeline_mode<synchronous>, transform_indices = @transform_2, window_bounds = array<i64: 16, 48>}, {pipeline_mode = #tpu.pipeline_mode<synchronous>, transform_indices = @transform_3, window_bounds = array<i64: 16, 1>}, {pipeline_mode = #tpu.pipeline_mode<synchronous>, transform_indices = @transform_4, window_bounds = array<i64: 16, 16>}, {pipeline_mode = #tpu.pipeline_mode<synchronous>, transform_indices = @transform_5, window_bounds = array<i64: 16, 1>}, {transform_indices = @transform_6, window_bounds = array<i64: 1, 16, 384>}]} {
    %c0 = arith.constant 0 : index
    %c0_0 = arith.constant 0 : index
    %c0_1 = arith.constant 0 : index
    %0 = vector.load %arg2[%c0, %c0_0, %c0_1] : memref<1x16x384xf32, #tpu.memory_space<vmem>>, vector<1x16x384xf32>
    %1 = vector.shape_cast %0 : vector<1x16x384xf32> to vector<16x384xf32>
    %cst = arith.constant 0.000000e+00 : f32
    %2 = vector.broadcast %cst : f32 to vector<16x384xf32>
    %3 = arith.cmpf ogt, %1, %2 : vector<16x384xf32>
    %cst_2 = arith.constant 2.000000e-01 : f32
    %4 = vector.broadcast %cst_2 : f32 to vector<16x384xf32>
    %5 = arith.mulf %4, %1 : vector<16x384xf32>
    %6 = arith.select %3, %1, %5 : vector<16x384xi1>, vector<16x384xf32>
    %c0_3 = arith.constant 0 : index
    %c0_4 = arith.constant 0 : index
    %c0_5 = arith.constant 0 : index
    %c0_6 = arith.constant 0 : index
    %7 = vector.load %arg3[%c0_3, %c0_4, %c0_5, %c0_6] : memref<1x1x16x2xf32, #tpu.memory_space<vmem>>, vector<1x1x16x1xf32>
    %8 = vector.shape_cast %7 : vector<1x1x16x1xf32> to vector<16x1xf32>
    %cst_7 = arith.constant 0.000000e+00 : f32
    %9 = vector.broadcast %cst_7 : f32 to vector<16x1xf32>
    %10 = arith.cmpf ogt, %8, %9 : vector<16x1xf32>
    %cst_8 = arith.constant 2.000000e-01 : f32
    %11 = vector.broadcast %cst_8 : f32 to vector<16x1xf32>
    %12 = arith.mulf %11, %8 : vector<16x1xf32>
    %13 = arith.select %10, %8, %12 : vector<16x1xi1>, vector<16x1xf32>
    %c0_9 = arith.constant 0 : index
    %c0_10 = arith.constant 0 : index
    %c0_11 = arith.constant 0 : index
    %c1 = arith.constant 1 : index
    %14 = vector.load %arg3[%c0_9, %c0_10, %c0_11, %c1] : memref<1x1x16x2xf32, #tpu.memory_space<vmem>>, vector<1x1x16x1xf32>
    %15 = vector.shape_cast %14 : vector<1x1x16x1xf32> to vector<16x1xf32>
    %cst_12 = arith.constant 0.000000e+00 : f32
    %16 = vector.broadcast %cst_12 : f32 to vector<16x1xf32>
    %17 = arith.cmpf ogt, %15, %16 : vector<16x1xf32>
    %cst_13 = arith.constant 2.000000e-01 : f32
    %18 = vector.broadcast %cst_13 : f32 to vector<16x1xf32>
    %19 = arith.mulf %18, %15 : vector<16x1xf32>
    %20 = arith.select %17, %15, %19 : vector<16x1xi1>, vector<16x1xf32>
    %c1_i32 = arith.constant 1 : i32
    %21 = tpu.dynamic_rotate %6 by %c1_i32 dim 1 : vector<16x384xf32>, i32 -> vector<16x384xf32>
    %22 = arith.truncf %21 : vector<16x384xf32> to vector<16x384xbf16>
    %c0_14 = arith.constant 0 : index
    %c0_15 = arith.constant 0 : index
    %23 = vector.load %arg9[%c0_14, %c0_15] : memref<48x384xbf16, #tpu.memory_space<vmem>>, vector<16x384xbf16>
    tpu.vector_store %arg9[%c0_14, %c0_15], %22 {strides = array<i32>} : memref<48x384xbf16, #tpu.memory_space<vmem>>, vector<16x384xbf16>,
    %24 = arith.truncf %6 : vector<16x384xf32> to vector<16x384xbf16>
    %c16 = arith.constant 16 : index
    %c0_16 = arith.constant 0 : index
    %25 = vector.load %arg9[%c16, %c0_16] : memref<48x384xbf16, #tpu.memory_space<vmem>>, vector<16x384xbf16>
    tpu.vector_store %arg9[%c16, %c0_16], %24 {strides = array<i32>} : memref<48x384xbf16, #tpu.memory_space<vmem>>, vector<16x384xbf16>,
    %c383_i32 = arith.constant 383 : i32
    %26 = tpu.dynamic_rotate %6 by %c383_i32 dim 1 : vector<16x384xf32>, i32 -> vector<16x384xf32>
    %27 = arith.truncf %26 : vector<16x384xf32> to vector<16x384xbf16>
    %c32 = arith.constant 32 : index
    %c0_17 = arith.constant 0 : index
    %28 = vector.load %arg9[%c32, %c0_17] : memref<48x384xbf16, #tpu.memory_space<vmem>>, vector<16x384xbf16>
    tpu.vector_store %arg9[%c32, %c0_17], %27 {strides = array<i32>} : memref<48x384xbf16, #tpu.memory_space<vmem>>, vector<16x384xbf16>,
    %29 = arith.truncf %13 : vector<16x1xf32> to vector<16x1xbf16>
    %c0_18 = arith.constant 0 : index
    %c0_19 = arith.constant 0 : index
    %30 = vector.load %arg9[%c0_18, %c0_19] : memref<48x384xbf16, #tpu.memory_space<vmem>>, vector<16x1xbf16>
    tpu.vector_store %arg9[%c0_18, %c0_19], %29 {strides = array<i32>} : memref<48x384xbf16, #tpu.memory_space<vmem>>, vector<16x1xbf16>,
    %31 = arith.truncf %20 : vector<16x1xf32> to vector<16x1xbf16>
    %c32_20 = arith.constant 32 : index
    %c383 = arith.constant 383 : index
    %32 = vector.load %arg9[%c32_20, %c383] : memref<48x384xbf16, #tpu.memory_space<vmem>>, vector<16x1xbf16>
    tpu.vector_store %arg9[%c32_20, %c383], %31 {strides = array<i32>} : memref<48x384xbf16, #tpu.memory_space<vmem>>, vector<16x1xbf16>,
    %c0_21 = arith.constant 0 : index
    %c0_22 = arith.constant 0 : index
    %33 = vector.load %arg4[%c0_21, %c0_22] : memref<16x48xbf16, #tpu.memory_space<vmem>>, vector<16x48xbf16>
    %c0_23 = arith.constant 0 : index
    %c0_24 = arith.constant 0 : index
    %34 = vector.load %arg9[%c0_23, %c0_24] : memref<48x384xbf16, #tpu.memory_space<vmem>>, vector<48x384xbf16>
    %cst_25 = arith.constant dense<0.000000e+00> : vector<16x384xf32>
    %35 = tpu.matmul %33, %34, %cst_25 {dimension_numbers = #tpu.dot_dimension_numbers<[1], [0], [0], [1], [0, 0, 1, 1], [], []>} : vector<16x48xbf16>, vector<48x384xbf16>, vector<16x384xf32> -> vector<16x384xf32>
    %c0_26 = arith.constant 0 : index
    %c0_27 = arith.constant 0 : index
    %36 = vector.load %arg5[%c0_26, %c0_27] : memref<16x1xf32, #tpu.memory_space<vmem>>, vector<16x1xf32>
    %37 = vector.broadcast %36 : vector<16x1xf32> to vector<16x384xf32>
    %38 = arith.addf %35, %37 : vector<16x384xf32>
    %cst_28 = arith.constant 0.000000e+00 : f32
    %39 = vector.broadcast %cst_28 : f32 to vector<16x384xf32>
    %40 = arith.cmpf ogt, %38, %39 : vector<16x384xf32>
    %cst_29 = arith.constant 2.000000e-01 : f32
    %41 = vector.broadcast %cst_29 : f32 to vector<16x384xf32>
    %42 = arith.mulf %41, %38 : vector<16x384xf32>
    %43 = arith.select %40, %38, %42 : vector<16x384xi1>, vector<16x384xf32>
    %c0_30 = arith.constant 0 : index
    %c0_31 = arith.constant 0 : index
    %44 = vector.load %arg6[%c0_30, %c0_31] : memref<16x16xbf16, #tpu.memory_space<vmem>>, vector<16x16xbf16>
    %45 = arith.truncf %43 : vector<16x384xf32> to vector<16x384xbf16>
    %cst_32 = arith.constant dense<0.000000e+00> : vector<16x384xf32>
    %46 = tpu.matmul %44, %45, %cst_32 {dimension_numbers = #tpu.dot_dimension_numbers<[1], [0], [0], [1], [0, 0, 1, 1], [], []>} : vector<16x16xbf16>, vector<16x384xbf16>, vector<16x384xf32> -> vector<16x384xf32>
    %c0_33 = arith.constant 0 : index
    %c0_34 = arith.constant 0 : index
    %47 = vector.load %arg7[%c0_33, %c0_34] : memref<16x1xf32, #tpu.memory_space<vmem>>, vector<16x1xf32>
    %48 = vector.broadcast %47 : vector<16x1xf32> to vector<16x384xf32>
    %49 = arith.addf %46, %48 : vector<16x384xf32>
    %50 = arith.addf %49, %1 : vector<16x384xf32>
    %c0_35 = arith.constant 0 : index
    %c0_36 = arith.constant 0 : index
    %c0_37 = arith.constant 0 : index
    %51 = vector.load %arg8[%c0_35, %c0_36, %c0_37] : memref<1x16x384xf32, #tpu.memory_space<vmem>>, vector<1x16x384xf32>
    %52 = vector.shape_cast %51 : vector<1x16x384xf32> to vector<16x384xf32>
    %53 = vector.shape_cast %50 : vector<16x384xf32> to vector<1x16x384xf32>
    tpu.vector_store %arg8[%c0_35, %c0_36, %c0_37], %53 {strides = array<i32>} : memref<1x16x384xf32, #tpu.memory_space<vmem>>, vector<1x16x384xf32>,
    return
  }
  func.func @transform_0(%arg0: i32, %arg1: i32) -> (i32, i32, i32) {
    %c0_i32 = arith.constant 0 : i32
    %c0_i32_0 = arith.constant 0 : i32
    return %arg0, %c0_i32, %arg1 : i32, i32, i32
  }
  func.func @transform_1(%arg0: i32, %arg1: i32) -> (i32, i32, i32, i32) {
    %c0_i32 = arith.constant 0 : i32
    %c0_i32_0 = arith.constant 0 : i32
    %c0_i32_1 = arith.constant 0 : i32
    return %arg0, %arg1, %c0_i32, %c0_i32_0 : i32, i32, i32, i32
  }
  func.func @transform_2(%arg0: i32, %arg1: i32) -> (i32, i32) {
    %c0_i32 = arith.constant 0 : i32
    %c0_i32_0 = arith.constant 0 : i32
    %c0_i32_1 = arith.constant 0 : i32
    return %c0_i32, %c0_i32_0 : i32, i32
  }
  func.func @transform_3(%arg0: i32, %arg1: i32) -> (i32, i32) {
    %c0_i32 = arith.constant 0 : i32
    %c0_i32_0 = arith.constant 0 : i32
    %c0_i32_1 = arith.constant 0 : i32
    return %c0_i32, %c0_i32_0 : i32, i32
  }
  func.func @transform_4(%arg0: i32, %arg1: i32) -> (i32, i32) {
    %c0_i32 = arith.constant 0 : i32
    %c0_i32_0 = arith.constant 0 : i32
    %c0_i32_1 = arith.constant 0 : i32
    return %c0_i32, %c0_i32_0 : i32, i32
  }
  func.func @transform_5(%arg0: i32, %arg1: i32) -> (i32, i32) {
    %c0_i32 = arith.constant 0 : i32
    %c0_i32_0 = arith.constant 0 : i32
    %c0_i32_1 = arith.constant 0 : i32
    return %c0_i32, %c0_i32_0 : i32, i32
  }
  func.func @transform_6(%arg0: i32, %arg1: i32) -> (i32, i32, i32) {
    %c0_i32 = arith.constant 0 : i32
    %c0_i32_0 = arith.constant 0 : i32
    return %arg0, %c0_i32, %arg1 : i32, i32, i32
  }
}

</mosaic_0001>

<llo_original>
// kernel: tpu_custom_call.1
$region0: #{tpu_custom_call.1}
  #allocation0 [shape = 'u32[]', space=smem, size = 0x4, offset = 0x4, fixed_abs, tag = 'smem constant byte address 0x4 - core index']
  #allocation1 [shape = 'u32[144,128]{1,0:T(1,128)}', space=vmem, size = 0x12000, scoped, tag = 'internal scratch']
  #allocation2 [shape = 'bf16[48,384]{1,0:T(16,128)(2,1)}', space=vmem, size = 0x9000, scoped, tag = 'scratch operand']
  %s0 = inlined_call_operand.hbm [shape: f32[2,16,384], index: 0, kind: input, shape index: {}]
  %s1 = inlined_call_operand.vmem [shape: f32[2,1,16,2], index: 1, kind: input, shape index: {}]
  %s2 = inlined_call_operand.vmem [shape: bf16[16,48], index: 2, kind: input, shape index: {}]
  %s3 = inlined_call_operand.vmem [shape: f32[16,1], index: 3, kind: input, shape index: {}]
  %s4 = inlined_call_operand.vmem [shape: bf16[16,16], index: 4, kind: input, shape index: {}]
  %s5 = inlined_call_operand.vmem [shape: f32[16,1], index: 5, kind: input, shape index: {}]
  %s6 = inlined_call_operand.hbm [shape: f32[2,16,384], index: 6, kind: output, shape index: {}]
  %s7 = sld [smem:[#allocation0]]
  $region61: #{tpu_custom_call.1} parent=0
    _
  %s9 = ssub.s32 1, %s7
  %s10 = scalar_select 0, %s9, %s7
  $region1: #{tpu_custom_call.1} parent=0
    #allocation3 [shape = 'u8[49152]{0}', space=vmem, size = 0xc000, scoped, tag = 'input window, operand 0']
    #allocation4 [shape = 's32[2]{0}', space=sflag, size = 0x8, scoped, tag = 'scoped memory for tpu_custom_call.1']
    #allocation5 [shape = 's32[2]{0}', space=sflag, size = 0x8, scoped, tag = 'scoped memory for tpu_custom_call.1']
    #allocation6 [shape = 'u8[49152]{0}', space=vmem, size = 0xc000, scoped, tag = 'output window, operand 0']
    %11 = vsyncpa [#allocation4], 0
    %s12 = scalar_lea.sflag [#allocation4], 1
    %13 = vsyncpa %s12, 0
    %14 = vsyncpa [#allocation5], 0
    %s15 = scalar_lea.sflag [#allocation5], 1
    %16 = vsyncpa %s15, 0
    loop: start=0, step=1, limit=4
    $region2: #{tpu_custom_call.1} parent=1 // loop_pre_header
      _
    $region3: #{tpu_custom_call.1} parent=1 // loop_header
      %s18 = sphi 0, %s22
      %p19 = scmp.ge.s32.totalorder %s18, 4
      %s25 = sphi 0, %s37
      %s26 = sphi 0, %s33
      %s27 = sphi 0, %s25
      %s28 = sphi 0, %s26
      %s29 = sphi 0, %s27
      %s30 = sphi 0, %s28
      %s42 = sphi 0, %s44
      %s45 = sphi 0, %s42
      %s46 = sphi 0, %s45
      %s62 = sphi 0, %s46
      %s70 = sphi 0, %s72
      %s73 = sphi 0, %s70
      %s74 = sphi 0, %s73
      %s90 = sphi 0, %s74
      %s94 = sphi 0, %s94
      %s96 = sphi 0, %s94
      %s97 = sphi 0, %s96
      %s111 = sphi 0, %s97
      %s115 = sphi 0, %s115
      %s117 = sphi 0, %s115
      %s118 = sphi 0, %s117
      %s132 = sphi 0, %s118
      %s136 = sphi 0, %s136
      %s138 = sphi 0, %s136
      %s139 = sphi 0, %s138
      %s153 = sphi 0, %s139
      %s157 = sphi 0, %s157
      %s159 = sphi 0, %s157
      %s160 = sphi 0, %s159
      %s174 = sphi 0, %s160
      %s182 = sphi 0, %s184
      %s185 = sphi 0, %s182
      %s186 = sphi 0, %s185
      %s202 = sphi 0, %s186
    $region4: #{tpu_custom_call.1} parent=1 // loop_header_branch
      %21 = sbr.rel (%p19) target = $region8
    $region5: #{tpu_custom_call.1} parent=1 // loop_body
      %s23 = ssub.s32 %s18, 1
      %s24 = ssub.s32 %s18, 2
      %s31 = sadd.s32 1, %s26
      %p32 = scmp.ge.s32.totalorder %s31, 1
      %s33 = scalar_select %p32, 0, %s31
      %s34 = sadd.s32 1, %s25
      %s35 = scalar_select %p32, %s34, %s25
      %p36 = scmp.ge.s32.totalorder %s35, 2
      %s37 = scalar_select %p36, 0, %s35
      %s38 = ssub.s32 %s25, %s37
      %s39 = ssub.s32 %s26, %s33
      %s40 = sor.u32 %s38, %s39
      %p41 = scmp.eq.s32.totalorder %s40, 0
      %s43 = sadd.s32 %s42, 1
      %s44 = scalar_select %p41, %s42, %s43
      %p47 = pneg %p41
      %p48 = scmp.eq.s32.totalorder %s18, 1
      %p49 = por %p47, %p48
      %p50 = scmp.ne.s32.totalorder %s42, %s45
      %p51 = scmp.eq.s32.totalorder %s18, 0
      %p52 = por %p50, %p51
      %p53 = scmp.ne.s32.totalorder %s42, %s45
      %p54 = scmp.eq.s32.totalorder %s23, 1
      %p55 = por %p53, %p54
      %p56 = scmp.ne.s32.totalorder %s45, %s46
      %p57 = scmp.eq.s32.totalorder %s23, 0
      %p58 = por %p56, %p57
      %p59 = scmp.ne.s32.totalorder %s45, %s46
      %p60 = scmp.eq.s32.totalorder %s24, 1
      %p61 = por %p59, %p60
      %p63 = scmp.ne.s32.totalorder %s46, %s62
      %p64 = scmp.eq.s32.totalorder %s24, 0
      %p65 = por %p63, %p64
      %s66 = ssub.s32 %s25, %s37
      %s67 = ssub.s32 %s26, %s33
      %s68 = sor.u32 %s66, %s67
      %p69 = scmp.eq.s32.totalorder %s68, 0
      %s71 = sadd.s32 %s70, 1
      %s72 = scalar_select %p69, %s70, %s71
      %p75 = pneg %p69
      %p76 = scmp.eq.s32.totalorder %s18, 1
      %p77 = por %p75, %p76
      %p78 = scmp.ne.s32.totalorder %s70, %s73
      %p79 = scmp.eq.s32.totalorder %s18, 0
      %p80 = por %p78, %p79
      %p81 = scmp.ne.s32.totalorder %s70, %s73
      %p82 = scmp.eq.s32.totalorder %s23, 1
      %p83 = por %p81, %p82
      %p84 = scmp.ne.s32.totalorder %s73, %s74
      %p85 = scmp.eq.s32.totalorder %s23, 0
      %p86 = por %p84, %p85
      %p87 = scmp.ne.s32.totalorder %s73, %s74
      %p88 = scmp.eq.s32.totalorder %s24, 1
      %p89 = por %p87, %p88
      %p91 = scmp.ne.s32.totalorder %s74, %s90
      %p92 = scmp.eq.s32.totalorder %s24, 0
      %p93 = por %p91, %p92
      %s95 = sadd.s32 %s94, 1
      %p98 = scmp.eq.s32.totalorder %s18, 1
      %p99 = scmp.ne.s32.totalorder %s94, %s96
      %p100 = scmp.eq.s32.totalorder %s18, 0
      %p101 = por %p99, %p100
      %p102 = scmp.ne.s32.totalorder %s94, %s96
      %p103 = scmp.eq.s32.totalorder %s23, 1
      %p104 = por %p102, %p103
      %p105 = scmp.ne.s32.totalorder %s96, %s97
      %p106 = scmp.eq.s32.totalorder %s23, 0
      %p107 = por %p105, %p106
      %p108 = scmp.ne.s32.totalorder %s96, %s97
      %p109 = scmp.eq.s32.totalorder %s24, 1
      %p110 = por %p108, %p109
      %p112 = scmp.ne.s32.totalorder %s97, %s111
      %p113 = scmp.eq.s32.totalorder %s24, 0
      %p114 = por %p112, %p113
      %s116 = sadd.s32 %s115, 1
      %p119 = scmp.eq.s32.totalorder %s18, 1
      %p120 = scmp.ne.s32.totalorder %s115, %s117
      %p121 = scmp.eq.s32.totalorder %s18, 0
      %p122 = por %p120, %p121
      %p123 = scmp.ne.s32.totalorder %s115, %s117
      %p124 = scmp.eq.s32.totalorder %s23, 1
      %p125 = por %p123, %p124
      %p126 = scmp.ne.s32.totalorder %s117, %s118
      %p127 = scmp.eq.s32.totalorder %s23, 0
      %p128 = por %p126, %p127
      %p129 = scmp.ne.s32.totalorder %s117, %s118
      %p130 = scmp.eq.s32.totalorder %s24, 1
      %p131 = por %p129, %p130
      %p133 = scmp.ne.s32.totalorder %s118, %s132
      %p134 = scmp.eq.s32.totalorder %s24, 0
      %p135 = por %p133, %p134
      %s137 = sadd.s32 %s136, 1
      %p140 = scmp.eq.s32.totalorder %s18, 1
      %p141 = scmp.ne.s32.totalorder %s136, %s138
      %p142 = scmp.eq.s32.totalorder %s18, 0
      %p143 = por %p141, %p142
      %p144 = scmp.ne.s32.totalorder %s136, %s138
      %p145 = scmp.eq.s32.totalorder %s23, 1
      %p146 = por %p144, %p145
      %p147 = scmp.ne.s32.totalorder %s138, %s139
      %p148 = scmp.eq.s32.totalorder %s23, 0
      %p149 = por %p147, %p148
      %p150 = scmp.ne.s32.totalorder %s138, %s139
      %p151 = scmp.eq.s32.totalorder %s24, 1
      %p152 = por %p150, %p151
      %p154 = scmp.ne.s32.totalorder %s139, %s153
      %p155 = scmp.eq.s32.totalorder %s24, 0
      %p156 = por %p154, %p155
      %s158 = sadd.s32 %s157, 1
      %p161 = scmp.eq.s32.totalorder %s18, 1
      %p162 = scmp.ne.s32.totalorder %s157, %s159
      %p163 = scmp.eq.s32.totalorder %s18, 0
      %p164 = por %p162, %p163
      %p165 = scmp.ne.s32.totalorder %s157, %s159
      %p166 = scmp.eq.s32.totalorder %s23, 1
      %p167 = por %p165, %p166
      %p168 = scmp.ne.s32.totalorder %s159, %s160
      %p169 = scmp.eq.s32.totalorder %s23, 0
      %p170 = por %p168, %p169
      %p171 = scmp.ne.s32.totalorder %s159, %s160
      %p172 = scmp.eq.s32.totalorder %s24, 1
      %p173 = por %p171, %p172
      %p175 = scmp.ne.s32.totalorder %s160, %s174
      %p176 = scmp.eq.s32.totalorder %s24, 0
      %p177 = por %p175, %p176
      %s178 = ssub.s32 %s25, %s37
      %s179 = ssub.s32 %s26, %s33
      %s180 = sor.u32 %s178, %s179
      %p181 = scmp.eq.s32.totalorder %s180, 0
      %s183 = sadd.s32 %s182, 1
      %s184 = scalar_select %p181, %s182, %s183
      %p187 = pneg %p181
      %p188 = scmp.eq.s32.totalorder %s18, 1
      %p189 = por %p187, %p188
      %p190 = scmp.ne.s32.totalorder %s182, %s185
      %p191 = scmp.eq.s32.totalorder %s18, 0
      %p192 = por %p190, %p191
      %p193 = scmp.ne.s32.totalorder %s182, %s185
      %p194 = scmp.eq.s32.totalorder %s23, 1
      %p195 = por %p193, %p194
      %p196 = scmp.ne.s32.totalorder %s185, %s186
      %p197 = scmp.eq.s32.totalorder %s23, 0
      %p198 = por %p196, %p197
      %p199 = scmp.ne.s32.totalorder %s185, %s186
      %p200 = scmp.eq.s32.totalorder %s24, 1
      %p201 = por %p199, %p200
      %p203 = scmp.ne.s32.totalorder %s186, %s202
      %p204 = scmp.eq.s32.totalorder %s24, 0
      %p205 = por %p203, %p204
      %p206 = scmp.le.s32.totalorder 1, %s18
      %p207 = scmp.lt.s32.totalorder %s18, 3
      %p208 = pnand %p206, %p207
      %p209 = pneg %p208
      // Predicated region
      $region9: #{tpu_custom_call.1} parent=5 // pred_check
        _
      $region10: #{tpu_custom_call.1} parent=5 // pred_check_branch
        %211 = sbr.rel (%p208) target = $region12
      $region11: #{tpu_custom_call.1} parent=5 // pred_region
        %s212 = ssub.s32 %s18, 1
        // Predicated region
        $region13: #{tpu_custom_call.1} parent=11 // pred_check
          %p213 = pneg %p107
        $region14: #{tpu_custom_call.1} parent=11 // pred_check_branch
          %215 = sbr.rel (%p213) target = $region16
        $region15: #{tpu_custom_call.1} parent=11 // pred_region
          _
        $region16: #{tpu_custom_call.1} parent=11 // pred_fallthru
          _
        // Predicated region
        $region17: #{tpu_custom_call.1} parent=11 // pred_check
          %p216 = pneg %p128
        $region18: #{tpu_custom_call.1} parent=11 // pred_check_branch
          %218 = sbr.rel (%p216) target = $region20
        $region19: #{tpu_custom_call.1} parent=11 // pred_region
          _
        $region20: #{tpu_custom_call.1} parent=11 // pred_fallthru
          _
        // Predicated region
        $region21: #{tpu_custom_call.1} parent=11 // pred_check
          %p219 = pneg %p149
        $region22: #{tpu_custom_call.1} parent=11 // pred_check_branch
          %221 = sbr.rel (%p219) target = $region24
        $region23: #{tpu_custom_call.1} parent=11 // pred_region
          _
        $region24: #{tpu_custom_call.1} parent=11 // pred_fallthru
          _
        // Predicated region
        $region25: #{tpu_custom_call.1} parent=11 // pred_check
          %p222 = pneg %p170
        $region26: #{tpu_custom_call.1} parent=11 // pred_check_branch
          %224 = sbr.rel (%p222) target = $region28
        $region27: #{tpu_custom_call.1} parent=11 // pred_region
          _
        $region28: #{tpu_custom_call.1} parent=11 // pred_fallthru
          _
      $region12: #{tpu_custom_call.1} parent=5 // pred_fallthru
        _
      %p225 = scmp.lt.s32.totalorder %s18, 2
      // Predicated region
      $region29: #{tpu_custom_call.1} parent=5 // pred_check
        %p226 = pneg %p225
      $region30: #{tpu_custom_call.1} parent=5 // pred_check_branch
        %228 = sbr.rel (%p226) target = $region32
      $region31: #{tpu_custom_call.1} parent=5 // pred_region
        // Predicated region
        $region33: #{tpu_custom_call.1} parent=31 // pred_check
          %p229 = pneg %p52
        $region34: #{tpu_custom_call.1} parent=31 // pred_check_branch
          %231 = sbr.rel (%p229) target = $region36
        $region35: #{tpu_custom_call.1} parent=31 // pred_region
          %s232 = sand.u32 %s42, 1
          %s233 = scalar_lea.sflag [#allocation4], %s232
          %s234 = sand.u32 %s42, 1
          %s235 = smul.addr %s234, 48
          %s236 = scalar_lea.vmem [#allocation3], %s235
          %s237 = smul.u32 3, %s26
          %s239 = ssub.s32 768, 768
          %240 = vsyncadd %s233, %s239
          %s241 = smul.addr %s25, 6
          %s242 = sadd.s32 %s237, %s241
          %s243 = smul.addr %s242, 128
          %s244 = scalar_lea.hbm %s0, %s243
          %s245 = sshll.u32 %s236, 4
          %s246 = int_to_ptr.vmem [resolvable:$true] %s245
          %251 = dma.hbm_to_vmem [thread:$0]  %s244, 768, %s246, %s233, 384, 384, 24
        $region36: #{tpu_custom_call.1} parent=31 // pred_fallthru
          _
        // Predicated region
        $region37: #{tpu_custom_call.1} parent=31 // pred_check
          %p252 = pneg %p80
        $region38: #{tpu_custom_call.1} parent=31 // pred_check_branch
          %254 = sbr.rel (%p252) target = $region40
        $region39: #{tpu_custom_call.1} parent=31 // pred_region
          %p255 = scmp.lt.s32.totalorder %s25, 1
          %s256 = scalar_select %p255, %s25, 1
          %p257 = scmp.lt.s32.totalorder %s26, 0
          %s258 = scalar_select %p257, %s26, 0
          %s259 = smul.addr %s258, 2
          %s260 = smul.addr %s256, 2
          %s261 = sadd.s32 %s259, %s260
          %s262 = smul.addr %s261, 8
          %s263 = scalar_lea.vmem %s1, %s262
        $region40: #{tpu_custom_call.1} parent=31 // pred_fallthru
          _
      $region32: #{tpu_custom_call.1} parent=5 // pred_fallthru
        _
      %p264 = scmp.le.s32.totalorder 1, %s18
      %p265 = scmp.lt.s32.totalorder %s18, 3
      %p266 = pnand %p264, %p265
      %p267 = pneg %p266
      // Predicated region
      $region41: #{tpu_custom_call.1} parent=5 // pred_check
        _
      $region42: #{tpu_custom_call.1} parent=5 // pred_check_branch
        %269 = sbr.rel (%p266) target = $region44
      $region43: #{tpu_custom_call.1} parent=5 // pred_region
        %s270 = ssub.s32 %s18, 1
        %s271 = sand.u32 %s45, 1
        %s272 = scalar_lea.sflag [#allocation4], %s271
        %s273 = sand.u32 %s45, 1
        %s274 = smul.addr %s273, 48
        %s275 = scalar_lea.vmem [#allocation3], %s274
        // Predicated region
        $region45: #{tpu_custom_call.1} parent=43 // pred_check
          %p276 = pneg %p58
        $region46: #{tpu_custom_call.1} parent=43 // pred_check_branch
          %278 = sbr.rel (%p276) target = $region48
        $region47: #{tpu_custom_call.1} parent=43 // pred_region
          %279 = dma.done %s272, 768
        $region48: #{tpu_custom_call.1} parent=43 // pred_fallthru
          _
        %s280 = sand.u32 %s45, 1
        %s281 = scalar_lea.sflag [#allocation4], %s280
        %s282 = sand.u32 %s45, 1
        %s283 = smul.addr %s282, 48
        %s284 = scalar_lea.vmem [#allocation3], %s283
        %p285 = pneg %p58
        %p286 = pneg %p55
        %p287 = scmp.lt.s32.totalorder %s27, 1
        %s288 = scalar_select %p287, %s27, 1
        %p289 = scmp.lt.s32.totalorder %s28, 0
        %s290 = scalar_select %p289, %s28, 0
        %s291 = smul.addr %s290, 2
        %s292 = smul.addr %s288, 2
        %s293 = sadd.s32 %s291, %s292
        %s294 = smul.addr %s293, 8
        %s295 = scalar_lea.vmem %s1, %s294
        %p296 = pneg %p86
        %p297 = pneg %p83
        %p298 = pneg %p107
        %p299 = pneg %p104
        %p300 = pneg %p128
        %p301 = pneg %p125
        %p302 = pneg %p149
        %p303 = pneg %p146
        %p304 = pneg %p170
        %p305 = pneg %p167
        %p306 = pneg %p198
        %p307 = pneg %p195
        %s308 = sand.u32 %s185, 1
        %s309 = scalar_lea.sflag [#allocation5], %s308
        %s310 = sand.u32 %s185, 1
        %s311 = smul.addr %s310, 48
        %s312 = scalar_lea.vmem [#allocation6], %s311
        %s313 = smul.u32 3, %s28
        %p314 = scmp.lt.s32.totalorder %s27, 1
        %s315 = scalar_select %p314, %s27, 1
        %p316 = scmp.lt.s32.totalorder %s28, 0
        %s317 = scalar_select %p316, %s28, 0
        %s318 = smul.addr %s317, 2
        %s319 = smul.addr %s315, 2
        %s320 = sadd.s32 %s318, %s319
        %s321 = smul.addr %s320, 8
        %s322 = scalar_lea.vmem %s1, %s321
        %s323 = smul.u32 3, %s28
        %v325 = vld [vmem:[%s275] sm:$0xff]
        %v326 = vld [vmem:[%s275 + $0x8] sm:$0xff]
        %v327 = vld [vmem:[%s275 + $0x10] sm:$0xff]
        %v328 = vld [vmem:[%s275 + $0x18] sm:$0xff]
        %v329 = vld [vmem:[%s275 + $0x20] sm:$0xff]
        %v330 = vld [vmem:[%s275 + $0x28] sm:$0xff]
        %vm331 = vcmp.gt.f32.partialorder %v325, 0.0
        %vm332 = vcmp.gt.f32.partialorder %v326, 0.0
        %vm333 = vcmp.gt.f32.partialorder %v327, 0.0
        %vm334 = vcmp.gt.f32.partialorder %v328, 0.0
        %vm335 = vcmp.gt.f32.partialorder %v329, 0.0
        %vm336 = vcmp.gt.f32.partialorder %v330, 0.0
        %v337 = vmul.f32 %v325, 0.2
        %v338 = vmul.f32 %v326, 0.2
        %v339 = vmul.f32 %v327, 0.2
        %v340 = vmul.f32 %v328, 0.2
        %v341 = vmul.f32 %v329, 0.2
        %v342 = vmul.f32 %v330, 0.2
        %v343 = vsel %vm331, %v325, %v337
        %v344 = vsel %vm332, %v326, %v338
        %v345 = vsel %vm333, %v327, %v339
        %v346 = vsel %vm334, %v328, %v340
        %v347 = vsel %vm335, %v329, %v341
        %v348 = vsel %vm336, %v330, %v342
        %v349 = vld [vmem:[%s322] sm:$0xff]
        %v350 = vld [vmem:[%s322 + $0x8] sm:$0xff]
        %vm351 = vcmp.gt.f32.partialorder %v349, 0.0
        %vm352 = vcmp.gt.f32.partialorder %v350, 0.0
        %v353 = vmul.f32 %v349, 0.2
        %v354 = vmul.f32 %v350, 0.2
        %v355 = vsel %vm351, %v349, %v353
        %v356 = vsel %vm352, %v350, %v354
        %357 = vrot.lane.b32.xlu0 %v343, 1
        %v358 = vpop.permute.xlu0 %357
        %359 = vrot.lane.b32.xlu0 %v346, 1
        %v360 = vpop.permute.xlu0 %359
        %361 = vrot.lane.b32.xlu0 %v344, 1
        %v362 = vpop.permute.xlu0 %361
        %363 = vrot.lane.b32.xlu0 %v347, 1
        %v364 = vpop.permute.xlu0 %363
        %365 = vrot.lane.b32.xlu0 %v345, 1
        %v366 = vpop.permute.xlu0 %365
        %367 = vrot.lane.b32.xlu0 %v348, 1
        %v368 = vpop.permute.xlu0 %367
        %v369 = vlaneseq
        %v370 = vand.u32 %v369, 127
        %vm371 = vcmp.lt.s32.totalorder %v370, 1
        %v372 = vsel %vm371, %v362, %v366
        %v373 = vsel %vm371, %v364, %v368
        %v374 = vsel %vm371, %v358, %v362
        %v375 = vsel %vm371, %v360, %v364
        %v376 = vsel %vm371, %v366, %v358
        %v377 = vsel %vm371, %v368, %v360
        %v378 = vpack.c.bf16 %v377, %v376
        %v379 = vpack.c.bf16 %v375, %v374
        %v380 = vpack.c.bf16 %v373, %v372
        %381 = vst [vmem:[#allocation2] sm:$0xff] %v378
        %382 = vst [vmem:[#allocation2 + $0x8] sm:$0xff] %v379
        %383 = vst [vmem:[#allocation2 + $0x10] sm:$0xff] %v380
        %v384 = vpack.c.bf16 %v346, %v343
        %v385 = vpack.c.bf16 %v347, %v344
        %v386 = vpack.c.bf16 %v348, %v345
        %387 = vst [vmem:[#allocation2 + $0x18] sm:$0xff] %v384
        %388 = vst [vmem:[#allocation2 + $0x20] sm:$0xff] %v385
        %389 = vst [vmem:[#allocation2 + $0x28] sm:$0xff] %v386
        %390 = vrot.lane.b32.xlu0 %v343, 127
        %v391 = vpop.permute.xlu0 %390
        %392 = vrot.lane.b32.xlu0 %v346, 127
        %v393 = vpop.permute.xlu0 %392
        %394 = vrot.lane.b32.xlu0 %v344, 127
        %v395 = vpop.permute.xlu0 %394
        %396 = vrot.lane.b32.xlu0 %v347, 127
        %v397 = vpop.permute.xlu0 %396
        %398 = vrot.lane.b32.xlu0 %v345, 127
        %v399 = vpop.permute.xlu0 %398
        %400 = vrot.lane.b32.xlu0 %v348, 127
        %v401 = vpop.permute.xlu0 %400
        %vm402 = vcmp.lt.s32.totalorder %v370, 127
        %v403 = vsel %vm402, %v395, %v399
        %v404 = vsel %vm402, %v397, %v401
        %v405 = vsel %vm402, %v391, %v395
        %v406 = vsel %vm402, %v393, %v397
        %v407 = vsel %vm402, %v399, %v391
        %v408 = vsel %vm402, %v401, %v393
        %v409 = vpack.c.bf16 %v406, %v405
        %v410 = vpack.c.bf16 %v404, %v403
        %v411 = vpack.c.bf16 %v408, %v407
        %412 = vst [vmem:[#allocation2 + $0x30] sm:$0xff] %v409
        %413 = vst [vmem:[#allocation2 + $0x38] sm:$0xff] %v410
        %414 = vst [vmem:[#allocation2 + $0x40] sm:$0xff] %v411
        %v415 = vpack.c.bf16 %v356, %v355
        %vm416 = vcmask 7168
        %417 = vst.msk [vmem:[#allocation2] sm:$0xff] %vm416, %v415
        %419 = vrot.lane.b32.xlu0 %v415, 126
        %v420 = vpop.permute.xlu0 %419
        %vm422 = vcmask 1048568
        %423 = vst.msk [vmem:[#allocation2 + $0x40] sm:$0xff] %vm422, %v420
        %v424 = vld [vmem:[%s2] sm:$0xf]
        %v425 = vld [vmem:[%s2 + $0x4] sm:$0xf]
        %v426 = vld [vmem:[#allocation2] sm:$0xff]
        %v427 = vld [vmem:[#allocation2 + $0x8] sm:$0xff]
        %v428 = vld [vmem:[#allocation2 + $0x10] sm:$0xff]
        %v429 = vld [vmem:[#allocation2 + $0x18] sm:$0xff]
        %v430 = vld [vmem:[#allocation2 + $0x20] sm:$0xff]
        %v431 = vld [vmem:[#allocation2 + $0x28] sm:$0xff]
        %v432 = vld [vmem:[#allocation2 + $0x30] sm:$0xff]
        %v433 = vld [vmem:[#allocation2 + $0x38] sm:$0xff]
        %v434 = vld [vmem:[#allocation2 + $0x40] sm:$0xff]
        %v435 = vld [vmem:[%s3] sm:$0xff]
        %v436 = vld [vmem:[%s3 + $0x8] sm:$0xff]
        %438 = vset.pattern.permute.xlu0 0
        %439 = vperm.xlu0 %438, %v435
        %v440 = vpop.permute.xlu0 %439
        %443 = vset.pattern.permute.xlu0 0
        %444 = vperm.xlu0 %443, %v436
        %v445 = vpop.permute.xlu0 %444
        %v449 = vunpack.c.l.b16 %v424
        %v450 = vunpack.c.l.b16 %v425
        %v451 = vpack.c.b16 %v450, %v449
        %vm452 = vcmask 392192
        %v454 = vsel %vm452, %v451, 0
        %456 = vmatprep.subr.bf16.mxu0 %v427
        %457 = vmatpush1.bf16.msra.mxu0 %v426
        %458 = vmatprep.subr.bf16.mxu0 %v430
        %459 = vmatpush1.bf16.msra.mxu0 %v429
        %460 = vmatprep.subr.bf16.mxu0 %v433
        %461 = vmatpush1.bf16.msra.mxu0 %v432
        %462 = vmatprep.subr.bf16.mxu0 0
        %463 = vmatpush1.bf16.msra.mxu0 0
        %464 = vmatprep.subr.bf16.mxu0 0
        %465 = vmatpush1.bf16.msra.mxu0 0
        %466 = vmatprep.subr.bf16.mxu0 0
        %467 = vmatpush1.bf16.msra.mxu0 0
        %468 = vmatprep.subr.bf16.mxu0 0
        %469 = vmatpush1.bf16.msra.mxu0 0
        %470 = vmatprep.subr.bf16.mxu0 0
        %471 = vmatpush1.bf16.msra.mxu0 0
        %472 = vmatprep.subr.bf16.mxu0 0
        %473 = vmatpush1.bf16.msra.mxu0 0
        %474 = vmatprep.subr.bf16.mxu0 0
        %475 = vmatpush1.bf16.msra.mxu0 0
        %476 = vmatprep.subr.bf16.mxu0 0
        %477 = vmatpush1.bf16.msra.mxu0 0
        %478 = vmatprep.subr.bf16.mxu0 0
        %479 = vmatpush1.bf16.msra.mxu0 0
        %480 = vmatprep.subr.bf16.mxu0 0
        %481 = vmatpush1.bf16.msra.mxu0 0
        %482 = vmatprep.subr.bf16.mxu0 0
        %483 = vmatpush1.bf16.msra.mxu0 0
        %484 = vmatprep.subr.bf16.mxu0 0
        %485 = vmatpush1.bf16.msra.mxu0 0
        %486 = vmatprep.subr.bf16.mxu0 0
        %487 = vmatpush1.bf16.msra.mxu0 0
        %488 = vmatprep.mubr.bf16.mxu0 0
        %489 = vmatmul.mubr.bf16.gmra.mrb[0].mxu0 %v454
        %v490 = vpop.f32.mrb[0].mxu0
        %v491 = vadd.f32 %v440, %v490
        %v492 = vpop.f32.mrb[0].mxu0
        %v493 = vadd.f32 %v440, %v492
        %v494 = vpop.f32.mrb[0].mxu0
        %v495 = vadd.f32 %v445, %v494
        %v496 = vpop.f32.mrb[0].mxu0
        %v497 = vadd.f32 %v445, %v496
        %498 = vdwg.mxu0
        %499 = vmatprep.subr.bf16.mxu0 0
        %500 = vmatpush1.bf16.msra.mxu0 %v428
        %501 = vmatprep.subr.bf16.mxu0 0
        %502 = vmatpush1.bf16.msra.mxu0 %v431
        %503 = vmatprep.subr.bf16.mxu0 0
        %504 = vmatpush1.bf16.msra.mxu0 %v434
        %505 = vmatprep.subr.bf16.mxu0 0
        %506 = vmatpush1.bf16.msra.mxu0 0
        %507 = vmatprep.subr.bf16.mxu0 0
        %508 = vmatpush1.bf16.msra.mxu0 0
        %509 = vmatprep.subr.bf16.mxu0 0
        %510 = vmatpush1.bf16.msra.mxu0 0
        %511 = vmatprep.subr.bf16.mxu0 0
        %512 = vmatpush1.bf16.msra.mxu0 0
        %513 = vmatprep.subr.bf16.mxu0 0
        %514 = vmatpush1.bf16.msra.mxu0 0
        %515 = vmatprep.subr.bf16.mxu0 0
        %516 = vmatpush1.bf16.msra.mxu0 0
        %517 = vmatprep.subr.bf16.mxu0 0
        %518 = vmatpush1.bf16.msra.mxu0 0
        %519 = vmatprep.subr.bf16.mxu0 0
        %520 = vmatpush1.bf16.msra.mxu0 0
        %521 = vmatprep.subr.bf16.mxu0 0
        %522 = vmatpush1.bf16.msra.mxu0 0
        %523 = vmatprep.subr.bf16.mxu0 0
        %524 = vmatpush1.bf16.msra.mxu0 0
        %525 = vmatprep.subr.bf16.mxu0 0
        %526 = vmatpush1.bf16.msra.mxu0 0
        %527 = vmatprep.subr.bf16.mxu0 0
        %528 = vmatpush1.bf16.msra.mxu0 0
        %529 = vmatprep.subr.bf16.mxu0 0
        %530 = vmatpush1.bf16.msra.mxu0 0
        %531 = vmatprep.mubr.bf16.mxu0 0
        %532 = vmatmul.mubr.bf16.gmra.mrb[0].mxu0 %v454
        %v533 = vpop.f32.mrb[0].mxu0
        %v534 = vadd.f32 %v440, %v533
        %v535 = vpop.f32.mrb[0].mxu0
        %v536 = vpop.f32.mrb[0].mxu0
        %v537 = vadd.f32 %v445, %v536
        %v538 = vpop.f32.mrb[0].mxu0
        %539 = vdwg.mxu0
        %vm540 = vcmp.gt.f32.partialorder %v491, 0.0
        %vm541 = vcmp.gt.f32.partialorder %v493, 0.0
        %vm542 = vcmp.gt.f32.partialorder %v534, 0.0
        %vm543 = vcmp.gt.f32.partialorder %v495, 0.0
        %vm544 = vcmp.gt.f32.partialorder %v497, 0.0
        %vm545 = vcmp.gt.f32.partialorder %v537, 0.0
        %v546 = vmul.f32 %v491, 0.2
        %v547 = vmul.f32 %v493, 0.2
        %v548 = vmul.f32 %v534, 0.2
        %v549 = vmul.f32 %v495, 0.2
        %v550 = vmul.f32 %v497, 0.2
        %v551 = vmul.f32 %v537, 0.2
        %v552 = vsel %vm540, %v491, %v546
        %v553 = vsel %vm541, %v493, %v547
        %v554 = vsel %vm542, %v534, %v548
        %v555 = vsel %vm543, %v495, %v549
        %v556 = vsel %vm544, %v497, %v550
        %v557 = vsel %vm545, %v537, %v551
        %v558 = vld [vmem:[%s4] sm:$0xf]
        %v559 = vld [vmem:[%s4 + $0x4] sm:$0xf]
        %v560 = vpack.c.bf16 %v555, %v552
        %v561 = vpack.c.bf16 %v556, %v553
        %v562 = vpack.c.bf16 %v557, %v554
        %v563 = vld [vmem:[%s5] sm:$0xff]
        %v564 = vld [vmem:[%s5 + $0x8] sm:$0xff]
        %566 = vset.pattern.permute.xlu0 0
        %567 = vperm.xlu0 %566, %v563
        %v568 = vpop.permute.xlu0 %567
        %571 = vset.pattern.permute.xlu0 0
        %572 = vperm.xlu0 %571, %v564
        %v573 = vpop.permute.xlu0 %572
        %v577 = vunpack.c.l.b16 %v558
        %v578 = vunpack.c.l.b16 %v559
        %v579 = vpack.c.b16 %v578, %v577
        %vm580 = vcmask 130048
        %v582 = vsel %vm580, %v579, 0
        %584 = vmatprep.subr.bf16.mxu0 %v561
        %585 = vmatpush1.bf16.msra.mxu0 %v560
        %586 = vmatprep.subr.bf16.mxu0 0
        %587 = vmatpush1.bf16.msra.mxu0 0
        %588 = vmatprep.subr.bf16.mxu0 0
        %589 = vmatpush1.bf16.msra.mxu0 0
        %590 = vmatprep.subr.bf16.mxu0 0
        %591 = vmatpush1.bf16.msra.mxu0 0
        %592 = vmatprep.subr.bf16.mxu0 0
        %593 = vmatpush1.bf16.msra.mxu0 0
        %594 = vmatprep.subr.bf16.mxu0 0
        %595 = vmatpush1.bf16.msra.mxu0 0
        %596 = vmatprep.subr.bf16.mxu0 0
        %597 = vmatpush1.bf16.msra.mxu0 0
        %598 = vmatprep.subr.bf16.mxu0 0
        %599 = vmatpush1.bf16.msra.mxu0 0
        %600 = vmatprep.subr.bf16.mxu0 0
        %601 = vmatpush1.bf16.msra.mxu0 0
        %602 = vmatprep.subr.bf16.mxu0 0
        %603 = vmatpush1.bf16.msra.mxu0 0
        %604 = vmatprep.subr.bf16.mxu0 0
        %605 = vmatpush1.bf16.msra.mxu0 0
        %606 = vmatprep.subr.bf16.mxu0 0
        %607 = vmatpush1.bf16.msra.mxu0 0
        %608 = vmatprep.subr.bf16.mxu0 0
        %609 = vmatpush1.bf16.msra.mxu0 0
        %610 = vmatprep.subr.bf16.mxu0 0
        %611 = vmatpush1.bf16.msra.mxu0 0
        %612 = vmatprep.subr.bf16.mxu0 0
        %613 = vmatpush1.bf16.msra.mxu0 0
        %614 = vmatprep.subr.bf16.mxu0 0
        %615 = vmatpush1.bf16.msra.mxu0 0
        %616 = vmatprep.mubr.bf16.mxu0 0
        %617 = vmatmul.mubr.bf16.gmra.mrb[0].mxu0 %v582
        %v618 = vpop.f32.mrb[0].mxu0
        %v619 = vadd.f32 %v568, %v618
        %v620 = vpop.f32.mrb[0].mxu0
        %v621 = vadd.f32 %v568, %v620
        %v622 = vpop.f32.mrb[0].mxu0
        %v623 = vadd.f32 %v573, %v622
        %v624 = vpop.f32.mrb[0].mxu0
        %v625 = vadd.f32 %v573, %v624
        %626 = vdwg.mxu0
        %627 = vmatprep.subr.bf16.mxu0 0
        %628 = vmatpush1.bf16.msra.mxu0 %v562
        %629 = vmatprep.subr.bf16.mxu0 0
        %630 = vmatpush1.bf16.msra.mxu0 0
        %631 = vmatprep.subr.bf16.mxu0 0
        %632 = vmatpush1.bf16.msra.mxu0 0
        %633 = vmatprep.subr.bf16.mxu0 0
        %634 = vmatpush1.bf16.msra.mxu0 0
        %635 = vmatprep.subr.bf16.mxu0 0
        %636 = vmatpush1.bf16.msra.mxu0 0
        %637 = vmatprep.subr.bf16.mxu0 0
        %638 = vmatpush1.bf16.msra.mxu0 0
        %639 = vmatprep.subr.bf16.mxu0 0
        %640 = vmatpush1.bf16.msra.mxu0 0
        %641 = vmatprep.subr.bf16.mxu0 0
        %642 = vmatpush1.bf16.msra.mxu0 0
        %643 = vmatprep.subr.bf16.mxu0 0
        %644 = vmatpush1.bf16.msra.mxu0 0
        %645 = vmatprep.subr.bf16.mxu0 0
        %646 = vmatpush1.bf16.msra.mxu0 0
        %647 = vmatprep.subr.bf16.mxu0 0
        %648 = vmatpush1.bf16.msra.mxu0 0
        %649 = vmatprep.subr.bf16.mxu0 0
        %650 = vmatpush1.bf16.msra.mxu0 0
        %651 = vmatprep.subr.bf16.mxu0 0
        %652 = vmatpush1.bf16.msra.mxu0 0
        %653 = vmatprep.subr.bf16.mxu0 0
        %654 = vmatpush1.bf16.msra.mxu0 0
        %655 = vmatprep.subr.bf16.mxu0 0
        %656 = vmatpush1.bf16.msra.mxu0 0
        %657 = vmatprep.subr.bf16.mxu0 0
        %658 = vmatpush1.bf16.msra.mxu0 0
        %659 = vmatprep.mubr.bf16.mxu0 0
        %660 = vmatmul.mubr.bf16.gmra.mrb[0].mxu0 %v582
        %v661 = vpop.f32.mrb[0].mxu0
        %v662 = vadd.f32 %v568, %v661
        %v663 = vpop.f32.mrb[0].mxu0
        %v664 = vpop.f32.mrb[0].mxu0
        %v665 = vadd.f32 %v573, %v664
        %v666 = vpop.f32.mrb[0].mxu0
        %667 = vdwg.mxu0
        %v668 = vadd.f32 %v619, %v325
        %v669 = vadd.f32 %v621, %v326
        %v670 = vadd.f32 %v662, %v327
        %v671 = vadd.f32 %v623, %v328
        %v672 = vadd.f32 %v625, %v329
        %v673 = vadd.f32 %v665, %v330
        %674 = vst [vmem:[%s312] sm:$0xff] %v668
        %675 = vst [vmem:[%s312 + $0x8] sm:$0xff] %v669
        %676 = vst [vmem:[%s312 + $0x10] sm:$0xff] %v670
        %677 = vst [vmem:[%s312 + $0x18] sm:$0xff] %v671
        %678 = vst [vmem:[%s312 + $0x20] sm:$0xff] %v672
        %679 = vst [vmem:[%s312 + $0x28] sm:$0xff] %v673
        %s680 = sand.u32 %s185, 1
        %s681 = scalar_lea.sflag [#allocation5], %s680
        %s682 = sand.u32 %s185, 1
        %s683 = smul.addr %s682, 48
        %s684 = scalar_lea.vmem [#allocation6], %s683
        // Predicated region
        $region49: #{tpu_custom_call.1} parent=43 // pred_check
          %p685 = pneg %p195
        $region50: #{tpu_custom_call.1} parent=43 // pred_check_branch
          %687 = sbr.rel (%p685) target = $region52
        $region51: #{tpu_custom_call.1} parent=43 // pred_region
          %s688 = smul.u32 3, %s28
          %s690 = ssub.s32 768, 768
          %691 = vsyncadd %s681, %s690
          %s692 = smul.addr %s27, 6
          %s693 = sadd.s32 %s688, %s692
          %s694 = smul.addr %s693, 128
          %s695 = scalar_lea.hbm %s6, %s694
          %s696 = sshll.u32 %s684, 4
          %s697 = int_to_ptr.vmem [resolvable:$true] %s696
          %702 = dma.vmem_to_hbm [thread:$0]  %s697, 768, %s695, %s681, 384, 384, 24
        $region52: #{tpu_custom_call.1} parent=43 // pred_fallthru
          _
      $region44: #{tpu_custom_call.1} parent=5 // pred_fallthru
        _
      %p703 = scmp.le.s32.totalorder 2, %s18
      // Predicated region
      $region53: #{tpu_custom_call.1} parent=5 // pred_check
        %p704 = pneg %p703
      $region54: #{tpu_custom_call.1} parent=5 // pred_check_branch
        %706 = sbr.rel (%p704) target = $region56
      $region55: #{tpu_custom_call.1} parent=5 // pred_region
        %s707 = ssub.s32 %s18, 2
        // Predicated region
        $region57: #{tpu_custom_call.1} parent=55 // pred_check
          %p708 = pneg %p201
        $region58: #{tpu_custom_call.1} parent=55 // pred_check_branch
          %710 = sbr.rel (%p708) target = $region60
        $region59: #{tpu_custom_call.1} parent=55 // pred_region
          %s711 = sand.u32 %s186, 1
          %s712 = scalar_lea.sflag [#allocation5], %s711
          %s713 = sand.u32 %s186, 1
          %s714 = smul.addr %s713, 48
          %s715 = scalar_lea.vmem [#allocation6], %s714
          %716 = dma.done %s712, 768
        $region60: #{tpu_custom_call.1} parent=55 // pred_fallthru
          _
      $region56: #{tpu_custom_call.1} parent=5 // pred_fallthru
        _
    $region6: #{tpu_custom_call.1} parent=1 // loop_footer
      %s22 = sadd.s32 1, %s18
    $region7: #{tpu_custom_call.1} parent=1 // loop_footer_branch
      %17 = sbr.rel target = $region3
    $region8: #{tpu_custom_call.1} parent=1 // loop_exit
      _
    %717 = vsyncpa [#allocation4], 1
    %s718 = scalar_lea.sflag [#allocation4], 1
    %719 = vsyncpa %s718, 1
    %720 = vsyncpa [#allocation5], 1
    %s721 = scalar_lea.sflag [#allocation5], 1
    %722 = vsyncpa %s721, 1

</llo_original>
